<compile_context>
chip_gen: v7x
topology: tpu7x:2x2x1
jax: 0.10.0
libtpu: 0.0.40
codegen_flags: <defaults>
</compile_context>

<pallas_src>
import jax
import jax.numpy as jnp
from jax.experimental import pallas as pl
from jax.experimental.pallas import tpu as pltpu

# ---- shapes implied by the module's forward ---------------------------------
H_CELLS, W_CELLS = 12, 24
IN_FEATS = H_CELLS * W_CELLS * 4      # 1152 = 9 * 128   (input_channels)
OUT_FEATS = H_CELLS * W_CELLS * 2     # 576              (output_channels)
OUT_PAD = 640                         # 5 * 128 -> lane-dense output tile
HID = 128                             # n_channels (rank bottleneck of the chain)

_HIGH = jax.lax.Precision.HIGHEST


def two_stage_kernel(x_ref, a_ref, bm_ref, bias_ref, o_ref):
    # int8 cells -> f32 -> bf16 on the VPU (exact for small integer cell values),
    # then two chained MXU matmuls through the rank-128 bottleneck, f32 accumulate,
    # f32 bias add, lane-dense (640-wide) store.
    x = x_ref[...].astype(jnp.float32).astype(jnp.bfloat16)
    h = jnp.dot(x, a_ref[...], preferred_element_type=jnp.float32)     # (M, 128) f32
    h = h.astype(jnp.bfloat16)
    o_ref[...] = (jnp.dot(h, bm_ref[...], preferred_element_type=jnp.float32)
                  + bias_ref[...])


def make_single_call():
    # Single board: (1, 1152) int8 in, (1, 640) f32 out (wrapper slices to 576).
    # block_shape == array shape, so the (8, 128) divisibility rule does not apply.
    full = lambda shape: pl.BlockSpec(shape, lambda: tuple(0 for _ in shape))
    return pl.pallas_call(
        two_stage_kernel,
        out_shape=jax.ShapeDtypeStruct((1, OUT_PAD), jnp.float32),
        grid=(),
        in_specs=[full((1, IN_FEATS)),          # x      (int8,  ~1.1 KiB)
                  full((IN_FEATS, HID)),        # A      (bf16,  ~288 KiB)
                  full((HID, OUT_PAD)),         # Bm     (bf16,  ~160 KiB)
                  full((1, OUT_PAD))],          # bias   (f32)
        out_specs=full((1, OUT_PAD)),
        compiler_params=pltpu.CompilerParams(
            vmem_limit_bytes=32 << 20),         # working set << 1 MiB
    )


def make_batched_call(m_pad, row_block):
    # Batched boards: tile M in row_block chunks; the weight/bias block indices are
    # constant across the grid (fetched once).  "parallel" lets v7x shard the row
    # blocks over both TensorCores when the grid has >= 2 steps.
    # NOTE: weights are small (<0.5 MiB bf16), so default double-buffering of the
    # constant blocks costs < 1 MiB VMEM; single-buffering (pl.Buffered(1)) is not
    # worth the extra constraint here.
    return pl.pallas_call(
        two_stage_kernel,
        out_shape=jax.ShapeDtypeStruct((m_pad, OUT_PAD), jnp.float32),
        grid=(m_pad // row_block,),
        in_specs=[pl.BlockSpec((row_block, IN_FEATS), lambda i: (i, 0)),
                  pl.BlockSpec((IN_FEATS, HID), lambda i: (0, 0)),
                  pl.BlockSpec((HID, OUT_PAD), lambda i: (0, 0)),
                  pl.BlockSpec((1, OUT_PAD), lambda i: (0, 0))],
        out_specs=pl.BlockSpec((row_block, OUT_PAD), lambda i: (i, 0)),
        compiler_params=pltpu.CompilerParams(
            dimension_semantics=("parallel",),
            vmem_limit_bytes=32 << 20),
    )


def _choose_row_block(batch):
    # >= 32 rows (int8 sublane packing), <= 256 (MXU row saturation), and about
    # ceil(B/2) so that large batches produce >= 2 grid steps (both v7x TCs busy).
    rb = -(-batch // 2)                 # ceil(B / 2)
    rb = ((rb + 31) // 32) * 32         # round up to a multiple of 32
    return max(32, min(256, rb))


# ---- parameters --------------------------------------------------------------
def init_params(key):
    """Deterministic init mirroring nn.Linear shapes (stored transposed)."""
    dims = [IN_FEATS, HID, HID, HID, OUT_FEATS]
    params = []
    for i in range(4):
        key, kw, kb = jax.random.split(key, 3)
        fan_in, fan_out = dims[i], dims[i + 1]
        bound = 1.0 / jnp.sqrt(fan_in)
        w = jax.random.uniform(kw, (fan_in, fan_out), jnp.float32, -bound, bound)
        b = jax.random.uniform(kb, (1, fan_out), jnp.float32, -bound, bound)
        params += [w, b]
    return params


def fold_params(params):
    """One-time low-rank fold of the 4 bias-only Linear layers.

    A  = W1                                           (1152, 128)   bf16
    Bm = W2 @ W3 @ W4                                  (128,  640)   bf16 (zero-padded cols)
    b  = ((b1 @ W2 + b2) @ W3 + b3) @ W4 + b4          (1,    640)   f32  (zero-padded)
    """
    w1, b1, w2, b2, w3, b3, w4, b4 = params
    dot = lambda a, b: jnp.dot(a, b, precision=_HIGH)
    a_fac = w1
    bm_fac = dot(dot(w2, w3), w4)                                    # (128, 576)
    bias = dot(dot(dot(b1, w2) + b2, w3) + b3, w4) + b4              # (1, 576)
    pad = OUT_PAD - OUT_FEATS
    bm_fac = jnp.pad(bm_fac, ((0, 0), (0, pad)))                     # lane-dense 640
    bias = jnp.pad(bias, ((0, 0), (0, pad)))
    return (a_fac.astype(jnp.bfloat16),
            bm_fac.astype(jnp.bfloat16),
            bias.astype(jnp.float32))


# ---- forward -----------------------------------------------------------------
def convert_as_input(cells):
    """Mirrors Model.convert_as_input: (12,24,4) int grid -> (1, 1152) int8."""
    # The original iterates a dict of cell objects on the host; here the grid is
    # already dense, so this is a pure reshape.  Cell values are tiny integers
    # (scrap/units/recycler/owner), so int8 is exact and cuts input HBM traffic 4x.
    return cells.reshape(1, IN_FEATS).astype(jnp.int8)


def forward(cells, fused_params):
    """Single board: (12, 24, 4) int -> (12, 24, 2) f32."""
    a_fac, bm_fac, bias = fused_params
    x = convert_as_input(cells)                          # (1, 1152) int8
    y = make_single_call()(x, a_fac, bm_fac, bias)       # (1, 640)
    return y[:, :OUT_FEATS].reshape(H_CELLS, W_CELLS, 2)


def forward_batched(cells_batch, fused_params):
    """Batched boards: (B, 12, 24, 4) int -> (B, 12, 24, 2) f32."""
    a_fac, bm_fac, bias = fused_params
    B = cells_batch.shape[0]
    rb = _choose_row_block(B)
    m_pad = ((B + rb - 1) // rb) * rb
    x = cells_batch.reshape(B, IN_FEATS).astype(jnp.int8)
    x = jnp.pad(x, ((0, m_pad - B), (0, 0)))             # zero rows sliced off below
    y = make_batched_call(m_pad, rb)(x, a_fac, bm_fac, bias)   # (m_pad, 640)
    return y[:B, :OUT_FEATS].reshape(B, H_CELLS, W_CELLS, 2)


# ---- pure-JAX reference (unfused 4-layer f32 chain, matches the PyTorch module) -
def forward_ref(cells, params):
    x = cells.astype(jnp.float32).reshape(-1)
    w1, b1, w2, b2, w3, b3, w4, b4 = params
    dot = lambda a, b: jnp.dot(a, b, precision=_HIGH)
    h = dot(x, w1) + b1[0]
    h = dot(h, w2) + b2[0]
    h = dot(h, w3) + b3[0]
    y = dot(h, w4) + b4[0]
    return y.reshape(H_CELLS, W_CELLS, 2)


if __name__ == "__main__":
    key = jax.random.PRNGKey(0)
    key, kc = jax.random.split(key)
    # Synthetic "cells" grid: small non-negative integers like scrap/units/owner.
    cells = jax.random.randint(kc, (H_CELLS, W_CELLS, 4), 0, 10, dtype=jnp.int32)
    params = init_params(key)
    fused = fold_params(params)          # done once, outside the hot path

    # Tolerance covers the algebraic re-association plus bf16 weight storage
    # (relative error ~1e-2 on O(1-5) outputs).
    ATOL, RTOL = 5e-2, 5e-2

    # --- single-board path ---
    y = jax.block_until_ready(forward(cells, fused))
    y_ref = forward_ref(cells, params)
    assert y.shape == (12, 24, 2)
    assert jnp.allclose(y, y_ref, atol=ATOL, rtol=RTOL)

    # --- batched path (amortizes dispatch + weight DMA; large blocks feed the MXU) ---
    key, kb = jax.random.split(key)
    B = 6
    cells_b = jax.random.randint(kb, (B, H_CELLS, W_CELLS, 4), 0, 10, dtype=jnp.int32)
    yb = jax.block_until_ready(forward_batched(cells_b, fused))
    yb_ref = jnp.stack([forward_ref(cells_b[i], params) for i in range(B)])
    assert yb.shape == (B, 12, 24, 2)
    assert jnp.allclose(yb, yb_ref, atol=ATOL, rtol=RTOL)

    print("KERNEL_OK")
</pallas_src>

<mosaic_0001>
module attributes {stable_mosaic.version = 11 : i64} {
  func.func @two_stage_kernel(%arg0: memref<1x1152xi8, #tpu.memory_space<vmem>>, %arg1: memref<1152x128xbf16, #tpu.memory_space<vmem>>, %arg2: memref<128x640xbf16, #tpu.memory_space<vmem>>, %arg3: memref<1x640xf32, #tpu.memory_space<vmem>>, %arg4: memref<1x640xf32, #tpu.memory_space<vmem>>) attributes {dimension_semantics = [], scalar_prefetch = 0 : i64, scratch_operands = 0 : i64, tpu.core_type = #tpu.core_type<tc>} {
    %c0 = arith.constant 0 : index
    %c0_0 = arith.constant 0 : index
    %0 = vector.load %arg0[%c0, %c0_0] : memref<1x1152xi8, #tpu.memory_space<vmem>>, vector<1x1152xi8>
    %1 = arith.sitofp %0 : vector<1x1152xi8> to vector<1x1152xf32>
    %2 = arith.truncf %1 : vector<1x1152xf32> to vector<1x1152xbf16>
    %c0_1 = arith.constant 0 : index
    %c0_2 = arith.constant 0 : index
    %3 = vector.load %arg1[%c0_1, %c0_2] : memref<1152x128xbf16, #tpu.memory_space<vmem>>, vector<1152x128xbf16>
    %cst = arith.constant dense<0.000000e+00> : vector<1x128xf32>
    %4 = tpu.matmul %2, %3, %cst {dimension_numbers = #tpu.dot_dimension_numbers<[1], [0], [0], [1], [0, 0, 1, 1], [], []>} : vector<1x1152xbf16>, vector<1152x128xbf16>, vector<1x128xf32> -> vector<1x128xf32>
    %5 = arith.truncf %4 : vector<1x128xf32> to vector<1x128xbf16>
    %c0_3 = arith.constant 0 : index
    %c0_4 = arith.constant 0 : index
    %6 = vector.load %arg2[%c0_3, %c0_4] : memref<128x640xbf16, #tpu.memory_space<vmem>>, vector<128x640xbf16>
    %cst_5 = arith.constant dense<0.000000e+00> : vector<1x640xf32>
    %7 = tpu.matmul %5, %6, %cst_5 {dimension_numbers = #tpu.dot_dimension_numbers<[1], [0], [0], [1], [0, 0, 1, 1], [], []>} : vector<1x128xbf16>, vector<128x640xbf16>, vector<1x640xf32> -> vector<1x640xf32>
    %c0_6 = arith.constant 0 : index
    %c0_7 = arith.constant 0 : index
    %8 = vector.load %arg3[%c0_6, %c0_7] : memref<1x640xf32, #tpu.memory_space<vmem>>, vector<1x640xf32>
    %9 = arith.addf %7, %8 : vector<1x640xf32>
    %c0_8 = arith.constant 0 : index
    %c0_9 = arith.constant 0 : index
    %10 = vector.load %arg4[%c0_8, %c0_9] : memref<1x640xf32, #tpu.memory_space<vmem>>, vector<1x640xf32>
    tpu.vector_store %arg4[%c0_8, %c0_9], %9 {strides = array<i32>} : memref<1x640xf32, #tpu.memory_space<vmem>>, vector<1x640xf32>,
    return
  }
}

</mosaic_0001>

<llo_original>
// kernel: tpu_custom_call.1
$region0: #{tpu_custom_call.1}
  #allocation0 [shape = 'u32[]', space=smem, size = 0x4, offset = 0x4, fixed_abs, tag = 'smem constant byte address 0x4 - core index']
  #allocation1 [shape = 'u32[144,128]{1,0:T(1,128)}', space=vmem, size = 0x12000, scoped, tag = 'internal scratch']
  %s0 = inlined_call_operand.hbm [shape: s8[1,1152], index: 0, kind: input, shape index: {}]
  %s1 = inlined_call_operand.hbm [shape: bf16[1152,128], index: 1, kind: input, shape index: {}]
  %s2 = inlined_call_operand.hbm [shape: bf16[128,640], index: 2, kind: input, shape index: {}]
  %s3 = inlined_call_operand.vmem [shape: f32[1,640], index: 3, kind: input, shape index: {}]
  %s4 = inlined_call_operand.hbm [shape: f32[1,640], index: 4, kind: output, shape index: {}]
  %s5 = sld [smem:[#allocation0]]
  $region38: #{tpu_custom_call.1} parent=0
    _
  %s7 = ssub.s32 1, %s5
  %s8 = scalar_select 0, %s7, %s5
  $region1: #{tpu_custom_call.1} parent=0
    #allocation2 [shape = 'u8[4608]{0}', space=vmem, size = 0x1400, scoped, tag = 'input window, operand 0, single buffered']
    #allocation3 [shape = 's32[1]{0}', space=sflag, size = 0x4, scoped, tag = 'scoped memory for tpu_custom_call.1']
    #allocation4 [shape = 's32[1]{0}', space=sflag, size = 0x4, scoped, tag = 'scoped memory for tpu_custom_call.1']
    #allocation5 [shape = 'u8[294912]{0}', space=vmem, size = 0x48000, scoped, tag = 'input window, operand 1, single buffered']
    #allocation6 [shape = 's32[1]{0}', space=sflag, size = 0x4, scoped, tag = 'scoped memory for tpu_custom_call.1']
    #allocation7 [shape = 'u8[163840]{0}', space=vmem, size = 0x28000, scoped, tag = 'input window, operand 2, single buffered']
    #allocation8 [shape = 'u8[2560]{0}', space=vmem, size = 0xc00, scoped, tag = 'output window, operand 0, single buffered']
    %9 = vsyncpa [#allocation3], 0
    %10 = vsyncpa [#allocation6], 0
    %11 = vsyncpa [#allocation4], 0
    // Predicated region
    $region2: #{tpu_custom_call.1} parent=1 // pred_check
      _
    $region3: #{tpu_custom_call.1} parent=1 // pred_check_branch
      %13 = sbr.rel (0) target = $region5
    $region4: #{tpu_custom_call.1} parent=1 // pred_region
      %s15 = ssub.s32 144, 144
      %16 = vsyncadd [#allocation3], %s15
      %s18 = sshll.u32 [#allocation2], 4
      %s19 = int_to_ptr.vmem [resolvable:$true] %s18
      %21 = dma.hbm_to_vmem [thread:$0]  %s0, 144, %s19, [#allocation3]
    $region5: #{tpu_custom_call.1} parent=1 // pred_fallthru
      _
    // Predicated region
    $region6: #{tpu_custom_call.1} parent=1 // pred_check
      _
    $region7: #{tpu_custom_call.1} parent=1 // pred_check_branch
      %23 = sbr.rel (0) target = $region9
    $region8: #{tpu_custom_call.1} parent=1 // pred_region
      %s25 = ssub.s32 9216, 9216
      %26 = vsyncadd [#allocation6], %s25
      %s27 = sshll.u32 [#allocation5], 4
      %s28 = int_to_ptr.vmem [resolvable:$true] %s27
      %33 = dma.hbm_to_vmem [thread:$0]  %s1, 9216, %s28, [#allocation6], 64, 64, 4
    $region9: #{tpu_custom_call.1} parent=1 // pred_fallthru
      _
    // Predicated region
    $region10: #{tpu_custom_call.1} parent=1 // pred_check
      _
    $region11: #{tpu_custom_call.1} parent=1 // pred_check_branch
      %35 = sbr.rel (0) target = $region13
    $region12: #{tpu_custom_call.1} parent=1 // pred_region
      %s37 = ssub.s32 5120, 5120
      %38 = vsyncadd [#allocation6], %s37
      %s39 = sshll.u32 [#allocation7], 4
      %s40 = int_to_ptr.vmem [resolvable:$true] %s39
      %45 = dma.hbm_to_vmem [thread:$0]  %s2, 5120, %s40, [#allocation6], 320, 320, 20
    $region13: #{tpu_custom_call.1} parent=1 // pred_fallthru
      _
    // Predicated region
    $region14: #{tpu_custom_call.1} parent=1 // pred_check
      _
    $region15: #{tpu_custom_call.1} parent=1 // pred_check_branch
      %47 = sbr.rel (0) target = $region17
    $region16: #{tpu_custom_call.1} parent=1 // pred_region
      _
    $region17: #{tpu_custom_call.1} parent=1 // pred_fallthru
      _
    // Predicated region
    $region18: #{tpu_custom_call.1} parent=1 // pred_check
      _
    $region19: #{tpu_custom_call.1} parent=1 // pred_check_branch
      %49 = sbr.rel (0) target = $region21
    $region20: #{tpu_custom_call.1} parent=1 // pred_region
      %50 = dma.done [#allocation3], 144
    $region21: #{tpu_custom_call.1} parent=1 // pred_fallthru
      _
    // Predicated region
    $region22: #{tpu_custom_call.1} parent=1 // pred_check
      _
    $region23: #{tpu_custom_call.1} parent=1 // pred_check_branch
      %52 = sbr.rel (0) target = $region25
    $region24: #{tpu_custom_call.1} parent=1 // pred_region
      %53 = dma.done [#allocation6], 9216
    $region25: #{tpu_custom_call.1} parent=1 // pred_fallthru
      _
    // Predicated region
    $region26: #{tpu_custom_call.1} parent=1 // pred_check
      _
    $region27: #{tpu_custom_call.1} parent=1 // pred_check_branch
      %55 = sbr.rel (0) target = $region29
    $region28: #{tpu_custom_call.1} parent=1 // pred_region
      %56 = dma.done [#allocation6], 5120
    $region29: #{tpu_custom_call.1} parent=1 // pred_fallthru
      _
    %v58 = vld [vmem:[#allocation2] sm:$0xff]
    %v59 = vld [vmem:[#allocation2 + $0x8] sm:$0x1]
    %v60 = vcombine.high %v58, %v58
    %v62 = vunpack.c.l.s4 1935823168
    %v63 = vunpack.c.0.s8 %v62
    %v64 = vlaneseq
    %v65 = vshrl.u32 %v64, 7
    %v66 = vsub.s32 %v63, %v65
    %v67 = vrot.slane %v58, %v66
    %v69 = vunpack.c.l.s4 1935823168
    %v70 = vunpack.c.0.s8 %v69
    %v71 = vlaneseq
    %v72 = vshrl.u32 %v71, 7
    %v73 = vsub.s32 %v70, %v72
    %v74 = vrot.slane %v60, %v73
    %v76 = vunpack.c.l.s4 1935823168
    %v77 = vunpack.c.0.s8 %v76
    %v78 = vlaneseq
    %v79 = vshrl.u32 %v78, 7
    %v80 = vsub.s32 %v77, %v79
    %v81 = vrot.slane %v59, %v80
    %v82 = vunpack.c.l.s8.bf16 %v67
    %v83 = vunpack.c.h.s8.bf16 %v67
    %v84 = vunpack.c.l.s8.bf16 %v74
    %v85 = vunpack.c.h.s8.bf16 %v74
    %v86 = vunpack.c.l.s8.bf16 %v81
    %v87 = vld [vmem:[#allocation5] sm:$0xf]
    %v88 = vld [vmem:[#allocation5 + $0x4] sm:$0xf]
    %v89 = vld [vmem:[#allocation5 + $0x8] sm:$0xf]
    %v90 = vld [vmem:[#allocation5 + $0xc] sm:$0xf]
    %v91 = vld [vmem:[#allocation5 + $0x10] sm:$0xf]
    %v92 = vld [vmem:[#allocation5 + $0x14] sm:$0xf]
    %v93 = vld [vmem:[#allocation5 + $0x18] sm:$0xf]
    %v94 = vld [vmem:[#allocation5 + $0x1c] sm:$0xf]
    %v95 = vld [vmem:[#allocation5 + $0x20] sm:$0xf]
    %v96 = vld [vmem:[#allocation5 + $0x24] sm:$0xf]
    %v97 = vld [vmem:[#allocation5 + $0x28] sm:$0xf]
    %v98 = vld [vmem:[#allocation5 + $0x2c] sm:$0xf]
    %v99 = vld [vmem:[#allocation5 + $0x30] sm:$0xf]
    %v100 = vld [vmem:[#allocation5 + $0x34] sm:$0xf]
    %v101 = vld [vmem:[#allocation5 + $0x38] sm:$0xf]
    %v102 = vld [vmem:[#allocation5 + $0x3c] sm:$0xf]
    %v103 = vld [vmem:[#allocation5 + $0x40] sm:$0xf]
    %v104 = vld [vmem:[#allocation5 + $0x44] sm:$0xf]
    %v105 = vld [vmem:[#allocation5 + $0x48] sm:$0xf]
    %v106 = vld [vmem:[#allocation5 + $0x4c] sm:$0xf]
    %v107 = vld [vmem:[#allocation5 + $0x50] sm:$0xf]
    %v108 = vld [vmem:[#allocation5 + $0x54] sm:$0xf]
    %v109 = vld [vmem:[#allocation5 + $0x58] sm:$0xf]
    %v110 = vld [vmem:[#allocation5 + $0x5c] sm:$0xf]
    %v111 = vld [vmem:[#allocation5 + $0x60] sm:$0xf]
    %v112 = vld [vmem:[#allocation5 + $0x64] sm:$0xf]
    %v113 = vld [vmem:[#allocation5 + $0x68] sm:$0xf]
    %v114 = vld [vmem:[#allocation5 + $0x6c] sm:$0xf]
    %v115 = vld [vmem:[#allocation5 + $0x70] sm:$0xf]
    %v116 = vld [vmem:[#allocation5 + $0x74] sm:$0xf]
    %v117 = vld [vmem:[#allocation5 + $0x78] sm:$0xf]
    %v118 = vld [vmem:[#allocation5 + $0x7c] sm:$0xf]
    %v119 = vld [vmem:[#allocation5 + $0x80] sm:$0xf]
    %v120 = vld [vmem:[#allocation5 + $0x84] sm:$0xf]
    %v121 = vld [vmem:[#allocation5 + $0x88] sm:$0xf]
    %v122 = vld [vmem:[#allocation5 + $0x8c] sm:$0xf]
    %v123 = vld [vmem:[#allocation5 + $0x90] sm:$0xf]
    %v124 = vld [vmem:[#allocation5 + $0x94] sm:$0xf]
    %v125 = vld [vmem:[#allocation5 + $0x98] sm:$0xf]
    %v126 = vld [vmem:[#allocation5 + $0x9c] sm:$0xf]
    %v127 = vld [vmem:[#allocation5 + $0xa0] sm:$0xf]
    %v128 = vld [vmem:[#allocation5 + $0xa4] sm:$0xf]
    %v129 = vld [vmem:[#allocation5 + $0xa8] sm:$0xf]
    %v130 = vld [vmem:[#allocation5 + $0xac] sm:$0xf]
    %v131 = vld [vmem:[#allocation5 + $0xb0] sm:$0xf]
    %v132 = vld [vmem:[#allocation5 + $0xb4] sm:$0xf]
    %v133 = vld [vmem:[#allocation5 + $0xb8] sm:$0xf]
    %v134 = vld [vmem:[#allocation5 + $0xbc] sm:$0xf]
    %v135 = vld [vmem:[#allocation5 + $0xc0] sm:$0xf]
    %v136 = vld [vmem:[#allocation5 + $0xc4] sm:$0xf]
    %v137 = vld [vmem:[#allocation5 + $0xc8] sm:$0xf]
    %v138 = vld [vmem:[#allocation5 + $0xcc] sm:$0xf]
    %v139 = vld [vmem:[#allocation5 + $0xd0] sm:$0xf]
    %v140 = vld [vmem:[#allocation5 + $0xd4] sm:$0xf]
    %v141 = vld [vmem:[#allocation5 + $0xd8] sm:$0xf]
    %v142 = vld [vmem:[#allocation5 + $0xdc] sm:$0xf]
    %v143 = vld [vmem:[#allocation5 + $0xe0] sm:$0xf]
    %v144 = vld [vmem:[#allocation5 + $0xe4] sm:$0xf]
    %v145 = vld [vmem:[#allocation5 + $0xe8] sm:$0xf]
    %v146 = vld [vmem:[#allocation5 + $0xec] sm:$0xf]
    %v147 = vld [vmem:[#allocation5 + $0xf0] sm:$0xf]
    %v148 = vld [vmem:[#allocation5 + $0xf4] sm:$0xf]
    %v149 = vld [vmem:[#allocation5 + $0xf8] sm:$0xf]
    %v150 = vld [vmem:[#allocation5 + $0xfc] sm:$0xf]
    %v151 = vld [vmem:[#allocation5 + $0x100] sm:$0xf]
    %v152 = vld [vmem:[#allocation5 + $0x104] sm:$0xf]
    %v153 = vld [vmem:[#allocation5 + $0x108] sm:$0xf]
    %v154 = vld [vmem:[#allocation5 + $0x10c] sm:$0xf]
    %v155 = vld [vmem:[#allocation5 + $0x110] sm:$0xf]
    %v156 = vld [vmem:[#allocation5 + $0x114] sm:$0xf]
    %v157 = vld [vmem:[#allocation5 + $0x118] sm:$0xf]
    %v158 = vld [vmem:[#allocation5 + $0x11c] sm:$0xf]
    %v159 = vld [vmem:[#allocation5 + $0x120] sm:$0xf]
    %v160 = vld [vmem:[#allocation5 + $0x124] sm:$0xf]
    %v161 = vld [vmem:[#allocation5 + $0x128] sm:$0xf]
    %v162 = vld [vmem:[#allocation5 + $0x12c] sm:$0xf]
    %v163 = vld [vmem:[#allocation5 + $0x130] sm:$0xf]
    %v164 = vld [vmem:[#allocation5 + $0x134] sm:$0xf]
    %v165 = vld [vmem:[#allocation5 + $0x138] sm:$0xf]
    %v166 = vld [vmem:[#allocation5 + $0x13c] sm:$0xf]
    %v167 = vld [vmem:[#allocation5 + $0x140] sm:$0xf]
    %v168 = vld [vmem:[#allocation5 + $0x144] sm:$0xf]
    %v169 = vld [vmem:[#allocation5 + $0x148] sm:$0xf]
    %v170 = vld [vmem:[#allocation5 + $0x14c] sm:$0xf]
    %v171 = vld [vmem:[#allocation5 + $0x150] sm:$0xf]
    %v172 = vld [vmem:[#allocation5 + $0x154] sm:$0xf]
    %v173 = vld [vmem:[#allocation5 + $0x158] sm:$0xf]
    %v174 = vld [vmem:[#allocation5 + $0x15c] sm:$0xf]
    %v175 = vld [vmem:[#allocation5 + $0x160] sm:$0xf]
    %v176 = vld [vmem:[#allocation5 + $0x164] sm:$0xf]
    %v177 = vld [vmem:[#allocation5 + $0x168] sm:$0xf]
    %v178 = vld [vmem:[#allocation5 + $0x16c] sm:$0xf]
    %v179 = vld [vmem:[#allocation5 + $0x170] sm:$0xf]
    %v180 = vld [vmem:[#allocation5 + $0x174] sm:$0xf]
    %v181 = vld [vmem:[#allocation5 + $0x178] sm:$0xf]
    %v182 = vld [vmem:[#allocation5 + $0x17c] sm:$0xf]
    %v183 = vld [vmem:[#allocation5 + $0x180] sm:$0xf]
    %v184 = vld [vmem:[#allocation5 + $0x184] sm:$0xf]
    %v185 = vld [vmem:[#allocation5 + $0x188] sm:$0xf]
    %v186 = vld [vmem:[#allocation5 + $0x18c] sm:$0xf]
    %v187 = vld [vmem:[#allocation5 + $0x190] sm:$0xf]
    %v188 = vld [vmem:[#allocation5 + $0x194] sm:$0xf]
    %v189 = vld [vmem:[#allocation5 + $0x198] sm:$0xf]
    %v190 = vld [vmem:[#allocation5 + $0x19c] sm:$0xf]
    %v191 = vld [vmem:[#allocation5 + $0x1a0] sm:$0xf]
    %v192 = vld [vmem:[#allocation5 + $0x1a4] sm:$0xf]
    %v193 = vld [vmem:[#allocation5 + $0x1a8] sm:$0xf]
    %v194 = vld [vmem:[#allocation5 + $0x1ac] sm:$0xf]
    %v195 = vld [vmem:[#allocation5 + $0x1b0] sm:$0xf]
    %v196 = vld [vmem:[#allocation5 + $0x1b4] sm:$0xf]
    %v197 = vld [vmem:[#allocation5 + $0x1b8] sm:$0xf]
    %v198 = vld [vmem:[#allocation5 + $0x1bc] sm:$0xf]
    %v199 = vld [vmem:[#allocation5 + $0x1c0] sm:$0xf]
    %v200 = vld [vmem:[#allocation5 + $0x1c4] sm:$0xf]
    %v201 = vld [vmem:[#allocation5 + $0x1c8] sm:$0xf]
    %v202 = vld [vmem:[#allocation5 + $0x1cc] sm:$0xf]
    %v203 = vld [vmem:[#allocation5 + $0x1d0] sm:$0xf]
    %v204 = vld [vmem:[#allocation5 + $0x1d4] sm:$0xf]
    %v205 = vld [vmem:[#allocation5 + $0x1d8] sm:$0xf]
    %v206 = vld [vmem:[#allocation5 + $0x1dc] sm:$0xf]
    %v207 = vld [vmem:[#allocation5 + $0x1e0] sm:$0xf]
    %v208 = vld [vmem:[#allocation5 + $0x1e4] sm:$0xf]
    %v209 = vld [vmem:[#allocation5 + $0x1e8] sm:$0xf]
    %v210 = vld [vmem:[#allocation5 + $0x1ec] sm:$0xf]
    %v211 = vld [vmem:[#allocation5 + $0x1f0] sm:$0xf]
    %v212 = vld [vmem:[#allocation5 + $0x1f4] sm:$0xf]
    %v213 = vld [vmem:[#allocation5 + $0x1f8] sm:$0xf]
    %v214 = vld [vmem:[#allocation5 + $0x1fc] sm:$0xf]
    %v215 = vld [vmem:[#allocation5 + $0x200] sm:$0xf]
    %v216 = vld [vmem:[#allocation5 + $0x204] sm:$0xf]
    %v217 = vld [vmem:[#allocation5 + $0x208] sm:$0xf]
    %v218 = vld [vmem:[#allocation5 + $0x20c] sm:$0xf]
    %v219 = vld [vmem:[#allocation5 + $0x210] sm:$0xf]
    %v220 = vld [vmem:[#allocation5 + $0x214] sm:$0xf]
    %v221 = vld [vmem:[#allocation5 + $0x218] sm:$0xf]
    %v222 = vld [vmem:[#allocation5 + $0x21c] sm:$0xf]
    %v223 = vld [vmem:[#allocation5 + $0x220] sm:$0xf]
    %v224 = vld [vmem:[#allocation5 + $0x224] sm:$0xf]
    %v225 = vld [vmem:[#allocation5 + $0x228] sm:$0xf]
    %v226 = vld [vmem:[#allocation5 + $0x22c] sm:$0xf]
    %v227 = vld [vmem:[#allocation5 + $0x230] sm:$0xf]
    %v228 = vld [vmem:[#allocation5 + $0x234] sm:$0xf]
    %v229 = vld [vmem:[#allocation5 + $0x238] sm:$0xf]
    %v230 = vld [vmem:[#allocation5 + $0x23c] sm:$0xf]
    %v236 = vunpack.c.l.b16 %v82
    %v237 = vunpack.c.h.b16 %v82
    %v238 = vunpack.c.l.b16 %v83
    %v239 = vunpack.c.h.b16 %v83
    %v240 = vunpack.c.l.b16 %v84
    %v241 = vunpack.c.h.b16 %v84
    %v242 = vunpack.c.l.b16 %v85
    %v243 = vunpack.c.h.b16 %v85
    %v244 = vunpack.c.l.b16 %v86
    %v245 = vpack.c.b16 %v236, %v236
    %v246 = vpack.c.b16 %v237, %v237
    %v247 = vpack.c.b16 %v238, %v238
    %v248 = vpack.c.b16 %v239, %v239
    %v249 = vpack.c.b16 %v240, %v240
    %v250 = vpack.c.b16 %v241, %v241
    %v251 = vpack.c.b16 %v242, %v242
    %v252 = vpack.c.b16 %v243, %v243
    %v253 = vpack.c.b16 %v244, %v244
    %v407 = vunpack.c.l.b16 %v87
    %v408 = vunpack.c.l.b16 %v88
    %v409 = vunpack.c.l.b16 %v89
    %v410 = vunpack.c.l.b16 %v90
    %v411 = vunpack.c.l.b16 %v91
    %v412 = vunpack.c.l.b16 %v92
    %v413 = vunpack.c.l.b16 %v93
    %v414 = vunpack.c.l.b16 %v94
    %v415 = vunpack.c.l.b16 %v95
    %v416 = vunpack.c.l.b16 %v96
    %v417 = vunpack.c.l.b16 %v97
    %v418 = vunpack.c.l.b16 %v98
    %v419 = vunpack.c.l.b16 %v99
    %v420 = vunpack.c.l.b16 %v100
    %v421 = vunpack.c.l.b16 %v101
    %v422 = vunpack.c.l.b16 %v102
    %v423 = vunpack.c.l.b16 %v103
    %v424 = vunpack.c.l.b16 %v104
    %v425 = vunpack.c.l.b16 %v105
    %v426 = vunpack.c.l.b16 %v106
    %v427 = vunpack.c.l.b16 %v107
    %v428 = vunpack.c.l.b16 %v108
    %v429 = vunpack.c.l.b16 %v109
    %v430 = vunpack.c.l.b16 %v110
    %v431 = vunpack.c.l.b16 %v111
    %v432 = vunpack.c.l.b16 %v112
    %v433 = vunpack.c.l.b16 %v113
    %v434 = vunpack.c.l.b16 %v114
    %v435 = vunpack.c.l.b16 %v115
    %v436 = vunpack.c.l.b16 %v116
    %v437 = vunpack.c.l.b16 %v117
    %v438 = vunpack.c.l.b16 %v118
    %v439 = vunpack.c.l.b16 %v119
    %v440 = vunpack.c.l.b16 %v120
    %v441 = vunpack.c.l.b16 %v121
    %v442 = vunpack.c.l.b16 %v122
    %v443 = vunpack.c.l.b16 %v123
    %v444 = vunpack.c.l.b16 %v124
    %v445 = vunpack.c.l.b16 %v125
    %v446 = vunpack.c.l.b16 %v126
    %v447 = vunpack.c.l.b16 %v127
    %v448 = vunpack.c.l.b16 %v128
    %v449 = vunpack.c.l.b16 %v129
    %v450 = vunpack.c.l.b16 %v130
    %v451 = vunpack.c.l.b16 %v131
    %v452 = vunpack.c.l.b16 %v132
    %v453 = vunpack.c.l.b16 %v133
    %v454 = vunpack.c.l.b16 %v134
    %v455 = vunpack.c.l.b16 %v135
    %v456 = vunpack.c.l.b16 %v136
    %v457 = vunpack.c.l.b16 %v137
    %v458 = vunpack.c.l.b16 %v138
    %v459 = vunpack.c.l.b16 %v139
    %v460 = vunpack.c.l.b16 %v140
    %v461 = vunpack.c.l.b16 %v141
    %v462 = vunpack.c.l.b16 %v142
    %v463 = vunpack.c.l.b16 %v143
    %v464 = vunpack.c.l.b16 %v144
    %v465 = vunpack.c.l.b16 %v145
    %v466 = vunpack.c.l.b16 %v146
    %v467 = vunpack.c.l.b16 %v147
    %v468 = vunpack.c.l.b16 %v148
    %v469 = vunpack.c.l.b16 %v149
    %v470 = vunpack.c.l.b16 %v150
    %v471 = vunpack.c.l.b16 %v151
    %v472 = vunpack.c.l.b16 %v152
    %v473 = vunpack.c.l.b16 %v153
    %v474 = vunpack.c.l.b16 %v154
    %v475 = vunpack.c.l.b16 %v155
    %v476 = vunpack.c.l.b16 %v156
    %v477 = vunpack.c.l.b16 %v157
    %v478 = vunpack.c.l.b16 %v158
    %v479 = vunpack.c.l.b16 %v159
    %v480 = vunpack.c.l.b16 %v160
    %v481 = vunpack.c.l.b16 %v161
    %v482 = vunpack.c.l.b16 %v162
    %v483 = vunpack.c.l.b16 %v163
    %v484 = vunpack.c.l.b16 %v164
    %v485 = vunpack.c.l.b16 %v165
    %v486 = vunpack.c.l.b16 %v166
    %v487 = vunpack.c.l.b16 %v167
    %v488 = vunpack.c.l.b16 %v168
    %v489 = vunpack.c.l.b16 %v169
    %v490 = vunpack.c.l.b16 %v170
    %v491 = vunpack.c.l.b16 %v171
    %v492 = vunpack.c.l.b16 %v172
    %v493 = vunpack.c.l.b16 %v173
    %v494 = vunpack.c.l.b16 %v174
    %v495 = vunpack.c.l.b16 %v175
    %v496 = vunpack.c.l.b16 %v176
    %v497 = vunpack.c.l.b16 %v177
    %v498 = vunpack.c.l.b16 %v178
    %v499 = vunpack.c.l.b16 %v179
    %v500 = vunpack.c.l.b16 %v180
    %v501 = vunpack.c.l.b16 %v181
    %v502 = vunpack.c.l.b16 %v182
    %v503 = vunpack.c.l.b16 %v183
    %v504 = vunpack.c.l.b16 %v184
    %v505 = vunpack.c.l.b16 %v185
    %v506 = vunpack.c.l.b16 %v186
    %v507 = vunpack.c.l.b16 %v187
    %v508 = vunpack.c.l.b16 %v188
    %v509 = vunpack.c.l.b16 %v189
    %v510 = vunpack.c.l.b16 %v190
    %v511 = vunpack.c.l.b16 %v191
    %v512 = vunpack.c.l.b16 %v192
    %v513 = vunpack.c.l.b16 %v193
    %v514 = vunpack.c.l.b16 %v194
    %v515 = vunpack.c.l.b16 %v195
    %v516 = vunpack.c.l.b16 %v196
    %v517 = vunpack.c.l.b16 %v197
    %v518 = vunpack.c.l.b16 %v198
    %v519 = vunpack.c.l.b16 %v199
    %v520 = vunpack.c.l.b16 %v200
    %v521 = vunpack.c.l.b16 %v201
    %v522 = vunpack.c.l.b16 %v202
    %v523 = vunpack.c.l.b16 %v203
    %v524 = vunpack.c.l.b16 %v204
    %v525 = vunpack.c.l.b16 %v205
    %v526 = vunpack.c.l.b16 %v206
    %v527 = vunpack.c.l.b16 %v207
    %v528 = vunpack.c.l.b16 %v208
    %v529 = vunpack.c.l.b16 %v209
    %v530 = vunpack.c.l.b16 %v210
    %v531 = vunpack.c.l.b16 %v211
    %v532 = vunpack.c.l.b16 %v212
    %v533 = vunpack.c.l.b16 %v213
    %v534 = vunpack.c.l.b16 %v214
    %v535 = vunpack.c.l.b16 %v215
    %v536 = vunpack.c.l.b16 %v216
    %v537 = vunpack.c.l.b16 %v217
    %v538 = vunpack.c.l.b16 %v218
    %v539 = vunpack.c.l.b16 %v219
    %v540 = vunpack.c.l.b16 %v220
    %v541 = vunpack.c.l.b16 %v221
    %v542 = vunpack.c.l.b16 %v222
    %v543 = vunpack.c.l.b16 %v223
    %v544 = vunpack.c.l.b16 %v224
    %v545 = vunpack.c.l.b16 %v225
    %v546 = vunpack.c.l.b16 %v226
    %v547 = vunpack.c.l.b16 %v227
    %v548 = vunpack.c.l.b16 %v228
    %v549 = vunpack.c.l.b16 %v229
    %v550 = vunpack.c.l.b16 %v230
    %v551 = vpack.c.b16 %v408, %v407
    %v552 = vpack.c.b16 %v410, %v409
    %v553 = vpack.c.b16 %v412, %v411
    %v554 = vpack.c.b16 %v414, %v413
    %v555 = vpack.c.b16 %v416, %v415
    %v556 = vpack.c.b16 %v418, %v417
    %v557 = vpack.c.b16 %v420, %v419
    %v558 = vpack.c.b16 %v422, %v421
    %v559 = vpack.c.b16 %v424, %v423
    %v560 = vpack.c.b16 %v426, %v425
    %v561 = vpack.c.b16 %v428, %v427
    %v562 = vpack.c.b16 %v430, %v429
    %v563 = vpack.c.b16 %v432, %v431
    %v564 = vpack.c.b16 %v434, %v433
    %v565 = vpack.c.b16 %v436, %v435
    %v566 = vpack.c.b16 %v438, %v437
    %v567 = vpack.c.b16 %v440, %v439
    %v568 = vpack.c.b16 %v442, %v441
    %v569 = vpack.c.b16 %v444, %v443
    %v570 = vpack.c.b16 %v446, %v445
    %v571 = vpack.c.b16 %v448, %v447
    %v572 = vpack.c.b16 %v450, %v449
    %v573 = vpack.c.b16 %v452, %v451
    %v574 = vpack.c.b16 %v454, %v453
    %v575 = vpack.c.b16 %v456, %v455
    %v576 = vpack.c.b16 %v458, %v457
    %v577 = vpack.c.b16 %v460, %v459
    %v578 = vpack.c.b16 %v462, %v461
    %v579 = vpack.c.b16 %v464, %v463
    %v580 = vpack.c.b16 %v466, %v465
    %v581 = vpack.c.b16 %v468, %v467
    %v582 = vpack.c.b16 %v470, %v469
    %v583 = vpack.c.b16 %v472, %v471
    %v584 = vpack.c.b16 %v474, %v473
    %v585 = vpack.c.b16 %v476, %v475
    %v586 = vpack.c.b16 %v478, %v477
    %v587 = vpack.c.b16 %v480, %v479
    %v588 = vpack.c.b16 %v482, %v481
    %v589 = vpack.c.b16 %v484, %v483
    %v590 = vpack.c.b16 %v486, %v485
    %v591 = vpack.c.b16 %v488, %v487
    %v592 = vpack.c.b16 %v490, %v489
    %v593 = vpack.c.b16 %v492, %v491
    %v594 = vpack.c.b16 %v494, %v493
    %v595 = vpack.c.b16 %v496, %v495
    %v596 = vpack.c.b16 %v498, %v497
    %v597 = vpack.c.b16 %v500, %v499
    %v598 = vpack.c.b16 %v502, %v501
    %v599 = vpack.c.b16 %v504, %v503
    %v600 = vpack.c.b16 %v506, %v505
    %v601 = vpack.c.b16 %v508, %v507
    %v602 = vpack.c.b16 %v510, %v509
    %v603 = vpack.c.b16 %v512, %v511
    %v604 = vpack.c.b16 %v514, %v513
    %v605 = vpack.c.b16 %v516, %v515
    %v606 = vpack.c.b16 %v518, %v517
    %v607 = vpack.c.b16 %v520, %v519
    %v608 = vpack.c.b16 %v522, %v521
    %v609 = vpack.c.b16 %v524, %v523
    %v610 = vpack.c.b16 %v526, %v525
    %v611 = vpack.c.b16 %v528, %v527
    %v612 = vpack.c.b16 %v530, %v529
    %v613 = vpack.c.b16 %v532, %v531
    %v614 = vpack.c.b16 %v534, %v533
    %v615 = vpack.c.b16 %v536, %v535
    %v616 = vpack.c.b16 %v538, %v537
    %v617 = vpack.c.b16 %v540, %v539
    %v618 = vpack.c.b16 %v542, %v541
    %v619 = vpack.c.b16 %v544, %v543
    %v620 = vpack.c.b16 %v546, %v545
    %v621 = vpack.c.b16 %v548, %v547
    %v622 = vpack.c.b16 %v550, %v549
    %695 = vmatprep.subr.bf16.mxu0 0
    %696 = vmatpush1.bf16.msra.mxu0 %v551
    %697 = vmatprep.subr.bf16.mxu0 0
    %698 = vmatpush1.bf16.msra.mxu0 %v552
    %699 = vmatprep.subr.bf16.mxu0 0
    %700 = vmatpush1.bf16.msra.mxu0 %v553
    %701 = vmatprep.subr.bf16.mxu0 0
    %702 = vmatpush1.bf16.msra.mxu0 %v554
    %703 = vmatprep.subr.bf16.mxu0 0
    %704 = vmatpush1.bf16.msra.mxu0 %v555
    %705 = vmatprep.subr.bf16.mxu0 0
    %706 = vmatpush1.bf16.msra.mxu0 %v556
    %707 = vmatprep.subr.bf16.mxu0 0
    %708 = vmatpush1.bf16.msra.mxu0 %v557
    %709 = vmatprep.subr.bf16.mxu0 0
    %710 = vmatpush1.bf16.msra.mxu0 %v558
    %711 = vmatprep.subr.bf16.mxu0 0
    %712 = vmatpush1.bf16.msra.mxu0 %v559
    %713 = vmatprep.subr.bf16.mxu0 0
    %714 = vmatpush1.bf16.msra.mxu0 %v560
    %715 = vmatprep.subr.bf16.mxu0 0
    %716 = vmatpush1.bf16.msra.mxu0 %v561
    %717 = vmatprep.subr.bf16.mxu0 0
    %718 = vmatpush1.bf16.msra.mxu0 %v562
    %719 = vmatprep.subr.bf16.mxu0 0
    %720 = vmatpush1.bf16.msra.mxu0 %v563
    %721 = vmatprep.subr.bf16.mxu0 0
    %722 = vmatpush1.bf16.msra.mxu0 %v564
    %723 = vmatprep.subr.bf16.mxu0 0
    %724 = vmatpush1.bf16.msra.mxu0 %v565
    %725 = vmatprep.subr.bf16.mxu0 0
    %726 = vmatpush1.bf16.msra.mxu0 %v566
    %727 = vmatprep.mubr.bf16.mxu0 %v246
    %728 = vmatmul.mubr.bf16.gmra.mrb[0].mxu0 %v245
    %v729 = vpop.f32.mrb[0].mxu0
    %v730 = vadd.f32 0.0, %v729
    %v731 = vpop.f32.mrb[0].mxu0
    %v732 = vpop.f32.mrb[0].mxu0
    %v733 = vpop.f32.mrb[0].mxu0
    %734 = vdwg.mxu0
    %735 = vmatprep.subr.bf16.mxu0 0
    %736 = vmatpush1.bf16.msra.mxu0 %v567
    %737 = vmatprep.subr.bf16.mxu0 0
    %738 = vmatpush1.bf16.msra.mxu0 %v568
    %739 = vmatprep.subr.bf16.mxu0 0
    %740 = vmatpush1.bf16.msra.mxu0 %v569
    %741 = vmatprep.subr.bf16.mxu0 0
    %742 = vmatpush1.bf16.msra.mxu0 %v570
    %743 = vmatprep.subr.bf16.mxu0 0
    %744 = vmatpush1.bf16.msra.mxu0 %v571
    %745 = vmatprep.subr.bf16.mxu0 0
    %746 = vmatpush1.bf16.msra.mxu0 %v572
    %747 = vmatprep.subr.bf16.mxu0 0
    %748 = vmatpush1.bf16.msra.mxu0 %v573
    %749 = vmatprep.subr.bf16.mxu0 0
    %750 = vmatpush1.bf16.msra.mxu0 %v574
    %751 = vmatprep.subr.bf16.mxu0 0
    %752 = vmatpush1.bf16.msra.mxu0 %v575
    %753 = vmatprep.subr.bf16.mxu0 0
    %754 = vmatpush1.bf16.msra.mxu0 %v576
    %755 = vmatprep.subr.bf16.mxu0 0
    %756 = vmatpush1.bf16.msra.mxu0 %v577
    %757 = vmatprep.subr.bf16.mxu0 0
    %758 = vmatpush1.bf16.msra.mxu0 %v578
    %759 = vmatprep.subr.bf16.mxu0 0
    %760 = vmatpush1.bf16.msra.mxu0 %v579
    %761 = vmatprep.subr.bf16.mxu0 0
    %762 = vmatpush1.bf16.msra.mxu0 %v580
    %763 = vmatprep.subr.bf16.mxu0 0
    %764 = vmatpush1.bf16.msra.mxu0 %v581
    %765 = vmatprep.subr.bf16.mxu0 0
    %766 = vmatpush1.bf16.msra.mxu0 %v582
    %767 = vmatprep.mubr.bf16.mxu0 %v248
    %768 = vmatmul.mubr.bf16.gmra.mrb[0].mxu0 %v247
    %v769 = vpop.f32.mrb[0].mxu0
    %v770 = vadd.f32 %v730, %v769
    %v771 = vpop.f32.mrb[0].mxu0
    %v772 = vpop.f32.mrb[0].mxu0
    %v773 = vpop.f32.mrb[0].mxu0
    %774 = vdwg.mxu0
    %775 = vmatprep.subr.bf16.mxu0 0
    %776 = vmatpush1.bf16.msra.mxu0 %v583
    %777 = vmatprep.subr.bf16.mxu0 0
    %778 = vmatpush1.bf16.msra.mxu0 %v584
    %779 = vmatprep.subr.bf16.mxu0 0
    %780 = vmatpush1.bf16.msra.mxu0 %v585
    %781 = vmatprep.subr.bf16.mxu0 0
    %782 = vmatpush1.bf16.msra.mxu0 %v586
    %783 = vmatprep.subr.bf16.mxu0 0
    %784 = vmatpush1.bf16.msra.mxu0 %v587
    %785 = vmatprep.subr.bf16.mxu0 0
    %786 = vmatpush1.bf16.msra.mxu0 %v588
    %787 = vmatprep.subr.bf16.mxu0 0
    %788 = vmatpush1.bf16.msra.mxu0 %v589
    %789 = vmatprep.subr.bf16.mxu0 0
    %790 = vmatpush1.bf16.msra.mxu0 %v590
    %791 = vmatprep.subr.bf16.mxu0 0
    %792 = vmatpush1.bf16.msra.mxu0 %v591
    %793 = vmatprep.subr.bf16.mxu0 0
    %794 = vmatpush1.bf16.msra.mxu0 %v592
    %795 = vmatprep.subr.bf16.mxu0 0
    %796 = vmatpush1.bf16.msra.mxu0 %v593
    %797 = vmatprep.subr.bf16.mxu0 0
    %798 = vmatpush1.bf16.msra.mxu0 %v594
    %799 = vmatprep.subr.bf16.mxu0 0
    %800 = vmatpush1.bf16.msra.mxu0 %v595
    %801 = vmatprep.subr.bf16.mxu0 0
    %802 = vmatpush1.bf16.msra.mxu0 %v596
    %803 = vmatprep.subr.bf16.mxu0 0
    %804 = vmatpush1.bf16.msra.mxu0 %v597
    %805 = vmatprep.subr.bf16.mxu0 0
    %806 = vmatpush1.bf16.msra.mxu0 %v598
    %807 = vmatprep.mubr.bf16.mxu0 %v250
    %808 = vmatmul.mubr.bf16.gmra.mrb[0].mxu0 %v249
    %v809 = vpop.f32.mrb[0].mxu0
    %v810 = vadd.f32 %v770, %v809
    %v811 = vpop.f32.mrb[0].mxu0
    %v812 = vpop.f32.mrb[0].mxu0
    %v813 = vpop.f32.mrb[0].mxu0
    %814 = vdwg.mxu0
    %815 = vmatprep.subr.bf16.mxu0 0
    %816 = vmatpush1.bf16.msra.mxu0 %v599
    %817 = vmatprep.subr.bf16.mxu0 0
    %818 = vmatpush1.bf16.msra.mxu0 %v600
    %819 = vmatprep.subr.bf16.mxu0 0
    %820 = vmatpush1.bf16.msra.mxu0 %v601
    %821 = vmatprep.subr.bf16.mxu0 0
    %822 = vmatpush1.bf16.msra.mxu0 %v602
    %823 = vmatprep.subr.bf16.mxu0 0
    %824 = vmatpush1.bf16.msra.mxu0 %v603
    %825 = vmatprep.subr.bf16.mxu0 0
    %826 = vmatpush1.bf16.msra.mxu0 %v604
    %827 = vmatprep.subr.bf16.mxu0 0
    %828 = vmatpush1.bf16.msra.mxu0 %v605
    %829 = vmatprep.subr.bf16.mxu0 0
    %830 = vmatpush1.bf16.msra.mxu0 %v606
    %831 = vmatprep.subr.bf16.mxu0 0
    %832 = vmatpush1.bf16.msra.mxu0 %v607
    %833 = vmatprep.subr.bf16.mxu0 0
    %834 = vmatpush1.bf16.msra.mxu0 %v608
    %835 = vmatprep.subr.bf16.mxu0 0
    %836 = vmatpush1.bf16.msra.mxu0 %v609
    %837 = vmatprep.subr.bf16.mxu0 0
    %838 = vmatpush1.bf16.msra.mxu0 %v610
    %839 = vmatprep.subr.bf16.mxu0 0
    %840 = vmatpush1.bf16.msra.mxu0 %v611
    %841 = vmatprep.subr.bf16.mxu0 0
    %842 = vmatpush1.bf16.msra.mxu0 %v612
    %843 = vmatprep.subr.bf16.mxu0 0
    %844 = vmatpush1.bf16.msra.mxu0 %v613
    %845 = vmatprep.subr.bf16.mxu0 0
    %846 = vmatpush1.bf16.msra.mxu0 %v614
    %847 = vmatprep.mubr.bf16.mxu0 %v252
    %848 = vmatmul.mubr.bf16.gmra.mrb[0].mxu0 %v251
    %v849 = vpop.f32.mrb[0].mxu0
    %v850 = vadd.f32 %v810, %v849
    %v851 = vpop.f32.mrb[0].mxu0
    %v852 = vpop.f32.mrb[0].mxu0
    %v853 = vpop.f32.mrb[0].mxu0
    %854 = vdwg.mxu0
    %855 = vmatprep.subr.bf16.mxu0 0
    %856 = vmatpush1.bf16.msra.mxu0 %v615
    %857 = vmatprep.subr.bf16.mxu0 0
    %858 = vmatpush1.bf16.msra.mxu0 %v616
    %859 = vmatprep.subr.bf16.mxu0 0
    %860 = vmatpush1.bf16.msra.mxu0 %v617
    %861 = vmatprep.subr.bf16.mxu0 0
    %862 = vmatpush1.bf16.msra.mxu0 %v618
    %863 = vmatprep.subr.bf16.mxu0 0
    %864 = vmatpush1.bf16.msra.mxu0 %v619
    %865 = vmatprep.subr.bf16.mxu0 0
    %866 = vmatpush1.bf16.msra.mxu0 %v620
    %867 = vmatprep.subr.bf16.mxu0 0
    %868 = vmatpush1.bf16.msra.mxu0 %v621
    %869 = vmatprep.subr.bf16.mxu0 0
    %870 = vmatpush1.bf16.msra.mxu0 %v622
    %871 = vmatprep.subr.bf16.mxu0 0
    %872 = vmatpush1.bf16.msra.mxu0 0
    %873 = vmatprep.subr.bf16.mxu0 0
    %874 = vmatpush1.bf16.msra.mxu0 0
    %875 = vmatprep.subr.bf16.mxu0 0
    %876 = vmatpush1.bf16.msra.mxu0 0
    %877 = vmatprep.subr.bf16.mxu0 0
    %878 = vmatpush1.bf16.msra.mxu0 0
    %879 = vmatprep.subr.bf16.mxu0 0
    %880 = vmatpush1.bf16.msra.mxu0 0
    %881 = vmatprep.subr.bf16.mxu0 0
    %882 = vmatpush1.bf16.msra.mxu0 0
    %883 = vmatprep.subr.bf16.mxu0 0
    %884 = vmatpush1.bf16.msra.mxu0 0
    %885 = vmatprep.subr.bf16.mxu0 0
    %886 = vmatpush1.bf16.msra.mxu0 0
    %887 = vmatprep.mubr.bf16.mxu0 0
    %888 = vmatmul.mubr.bf16.gmra.mrb[0].mxu0 %v253
    %v889 = vpop.f32.mrb[0].mxu0
    %v890 = vadd.f32 %v850, %v889
    %v891 = vpop.f32.mrb[0].mxu0
    %v892 = vpop.f32.mrb[0].mxu0
    %v893 = vpop.f32.mrb[0].mxu0
    %894 = vdwg.mxu0
    %v895 = vpack.c.bf16 %v890, %v890
    %v896 = vld [vmem:[#allocation7] sm:$0xff]
    %v897 = vld [vmem:[#allocation7 + $0x8] sm:$0xff]
    %v898 = vld [vmem:[#allocation7 + $0x10] sm:$0xf]
    %v899 = vld [vmem:[#allocation7 + $0x14] sm:$0xff]
    %v900 = vld [vmem:[#allocation7 + $0x1c] sm:$0xff]
    %v901 = vld [vmem:[#allocation7 + $0x24] sm:$0xf]
    %v902 = vld [vmem:[#allocation7 + $0x28] sm:$0xff]
    %v903 = vld [vmem:[#allocation7 + $0x30] sm:$0xff]
    %v904 = vld [vmem:[#allocation7 + $0x38] sm:$0xf]
    %v905 = vld [vmem:[#allocation7 + $0x3c] sm:$0xff]
    %v906 = vld [vmem:[#allocation7 + $0x44] sm:$0xff]
    %v907 = vld [vmem:[#allocation7 + $0x4c] sm:$0xf]
    %v908 = vld [vmem:[#allocation7 + $0x50] sm:$0xff]
    %v909 = vld [vmem:[#allocation7 + $0x58] sm:$0xff]
    %v910 = vld [vmem:[#allocation7 + $0x60] sm:$0xf]
    %v911 = vld [vmem:[#allocation7 + $0x64] sm:$0xff]
    %v912 = vld [vmem:[#allocation7 + $0x6c] sm:$0xff]
    %v913 = vld [vmem:[#allocation7 + $0x74] sm:$0xf]
    %v914 = vld [vmem:[#allocation7 + $0x78] sm:$0xff]
    %v915 = vld [vmem:[#allocation7 + $0x80] sm:$0xff]
    %v916 = vld [vmem:[#allocation7 + $0x88] sm:$0xf]
    %v917 = vld [vmem:[#allocation7 + $0x8c] sm:$0xff]
    %v918 = vld [vmem:[#allocation7 + $0x94] sm:$0xff]
    %v919 = vld [vmem:[#allocation7 + $0x9c] sm:$0xf]
    %v920 = vld [vmem:[#allocation7 + $0xa0] sm:$0xff]
    %v921 = vld [vmem:[#allocation7 + $0xa8] sm:$0xff]
    %v922 = vld [vmem:[#allocation7 + $0xb0] sm:$0xf]
    %v923 = vld [vmem:[#allocation7 + $0xb4] sm:$0xff]
    %v924 = vld [vmem:[#allocation7 + $0xbc] sm:$0xff]
    %v925 = vld [vmem:[#allocation7 + $0xc4] sm:$0xf]
    %v926 = vld [vmem:[#allocation7 + $0xc8] sm:$0xff]
    %v927 = vld [vmem:[#allocation7 + $0xd0] sm:$0xff]
    %v928 = vld [vmem:[#allocation7 + $0xd8] sm:$0xf]
    %v929 = vld [vmem:[#allocation7 + $0xdc] sm:$0xff]
    %v930 = vld [vmem:[#allocation7 + $0xe4] sm:$0xff]
    %v931 = vld [vmem:[#allocation7 + $0xec] sm:$0xf]
    %v932 = vld [vmem:[#allocation7 + $0xf0] sm:$0xff]
    %v933 = vld [vmem:[#allocation7 + $0xf8] sm:$0xff]
    %v934 = vld [vmem:[#allocation7 + $0x100] sm:$0xf]
    %v935 = vld [vmem:[#allocation7 + $0x104] sm:$0xff]
    %v936 = vld [vmem:[#allocation7 + $0x10c] sm:$0xff]
    %v937 = vld [vmem:[#allocation7 + $0x114] sm:$0xf]
    %v938 = vld [vmem:[#allocation7 + $0x118] sm:$0xff]
    %v939 = vld [vmem:[#allocation7 + $0x120] sm:$0xff]
    %v940 = vld [vmem:[#allocation7 + $0x128] sm:$0xf]
    %v941 = vld [vmem:[#allocation7 + $0x12c] sm:$0xff]
    %v942 = vld [vmem:[#allocation7 + $0x134] sm:$0xff]
    %v943 = vld [vmem:[#allocation7 + $0x13c] sm:$0xf]
    %v944 = vld [vmem:[%s3] sm:$0x1f]
    %v993 = vunpack.c.l.b16 %v896
    %v994 = vunpack.c.h.b16 %v896
    %v995 = vunpack.c.l.b16 %v897
    %v996 = vunpack.c.h.b16 %v897
    %v997 = vunpack.c.l.b16 %v898
    %v998 = vunpack.c.l.b16 %v899
    %v999 = vunpack.c.h.b16 %v899
    %v1000 = vunpack.c.l.b16 %v900
    %v1001 = vunpack.c.h.b16 %v900
    %v1002 = vunpack.c.l.b16 %v901
    %v1003 = vunpack.c.l.b16 %v902
    %v1004 = vunpack.c.h.b16 %v902
    %v1005 = vunpack.c.l.b16 %v903
    %v1006 = vunpack.c.h.b16 %v903
    %v1007 = vunpack.c.l.b16 %v904
    %v1008 = vunpack.c.l.b16 %v905
    %v1009 = vunpack.c.h.b16 %v905
    %v1010 = vunpack.c.l.b16 %v906
    %v1011 = vunpack.c.h.b16 %v906
    %v1012 = vunpack.c.l.b16 %v907
    %v1013 = vunpack.c.l.b16 %v908
    %v1014 = vunpack.c.h.b16 %v908
    %v1015 = vunpack.c.l.b16 %v909
    %v1016 = vunpack.c.h.b16 %v909
    %v1017 = vunpack.c.l.b16 %v910
    %v1018 = vunpack.c.l.b16 %v911
    %v1019 = vunpack.c.h.b16 %v911
    %v1020 = vunpack.c.l.b16 %v912
    %v1021 = vunpack.c.h.b16 %v912
    %v1022 = vunpack.c.l.b16 %v913
    %v1023 = vunpack.c.l.b16 %v914
    %v1024 = vunpack.c.h.b16 %v914
    %v1025 = vunpack.c.l.b16 %v915
    %v1026 = vunpack.c.h.b16 %v915
    %v1027 = vunpack.c.l.b16 %v916
    %v1028 = vunpack.c.l.b16 %v917
    %v1029 = vunpack.c.h.b16 %v917
    %v1030 = vunpack.c.l.b16 %v918
    %v1031 = vunpack.c.h.b16 %v918
    %v1032 = vunpack.c.l.b16 %v919
    %v1033 = vunpack.c.l.b16 %v920
    %v1034 = vunpack.c.h.b16 %v920
    %v1035 = vunpack.c.l.b16 %v921
    %v1036 = vunpack.c.h.b16 %v921
    %v1037 = vunpack.c.l.b16 %v922
    %v1038 = vunpack.c.l.b16 %v923
    %v1039 = vunpack.c.h.b16 %v923
    %v1040 = vunpack.c.l.b16 %v924
    %v1041 = vunpack.c.h.b16 %v924
    %v1042 = vunpack.c.l.b16 %v925
    %v1043 = vunpack.c.l.b16 %v926
    %v1044 = vunpack.c.h.b16 %v926
    %v1045 = vunpack.c.l.b16 %v927
    %v1046 = vunpack.c.h.b16 %v927
    %v1047 = vunpack.c.l.b16 %v928
    %v1048 = vunpack.c.l.b16 %v929
    %v1049 = vunpack.c.h.b16 %v929
    %v1050 = vunpack.c.l.b16 %v930
    %v1051 = vunpack.c.h.b16 %v930
    %v1052 = vunpack.c.l.b16 %v931
    %v1053 = vunpack.c.l.b16 %v932
    %v1054 = vunpack.c.h.b16 %v932
    %v1055 = vunpack.c.l.b16 %v933
    %v1056 = vunpack.c.h.b16 %v933
    %v1057 = vunpack.c.l.b16 %v934
    %v1058 = vunpack.c.l.b16 %v935
    %v1059 = vunpack.c.h.b16 %v935
    %v1060 = vunpack.c.l.b16 %v936
    %v1061 = vunpack.c.h.b16 %v936
    %v1062 = vunpack.c.l.b16 %v937
    %v1063 = vunpack.c.l.b16 %v938
    %v1064 = vunpack.c.h.b16 %v938
    %v1065 = vunpack.c.l.b16 %v939
    %v1066 = vunpack.c.h.b16 %v939
    %v1067 = vunpack.c.l.b16 %v940
    %v1068 = vunpack.c.l.b16 %v941
    %v1069 = vunpack.c.h.b16 %v941
    %v1070 = vunpack.c.l.b16 %v942
    %v1071 = vunpack.c.h.b16 %v942
    %v1072 = vunpack.c.l.b16 %v943
    %v1073 = vpack.c.b16 %v998, %v993
    %v1074 = vpack.c.b16 %v999, %v994
    %v1075 = vpack.c.b16 %v1000, %v995
    %v1076 = vpack.c.b16 %v1001, %v996
    %v1077 = vpack.c.b16 %v1002, %v997
    %v1078 = vpack.c.b16 %v1008, %v1003
    %v1079 = vpack.c.b16 %v1009, %v1004
    %v1080 = vpack.c.b16 %v1010, %v1005
    %v1081 = vpack.c.b16 %v1011, %v1006
    %v1082 = vpack.c.b16 %v1012, %v1007
    %v1083 = vpack.c.b16 %v1018, %v1013
    %v1084 = vpack.c.b16 %v1019, %v1014
    %v1085 = vpack.c.b16 %v1020, %v1015
    %v1086 = vpack.c.b16 %v1021, %v1016
    %v1087 = vpack.c.b16 %v1022, %v1017
    %v1088 = vpack.c.b16 %v1028, %v1023
    %v1089 = vpack.c.b16 %v1029, %v1024
    %v1090 = vpack.c.b16 %v1030, %v1025
    %v1091 = vpack.c.b16 %v1031, %v1026
    %v1092 = vpack.c.b16 %v1032, %v1027
    %v1093 = vpack.c.b16 %v1038, %v1033
    %v1094 = vpack.c.b16 %v1039, %v1034
    %v1095 = vpack.c.b16 %v1040, %v1035
    %v1096 = vpack.c.b16 %v1041, %v1036
    %v1097 = vpack.c.b16 %v1042, %v1037
    %v1098 = vpack.c.b16 %v1048, %v1043
    %v1099 = vpack.c.b16 %v1049, %v1044
    %v1100 = vpack.c.b16 %v1050, %v1045
    %v1101 = vpack.c.b16 %v1051, %v1046
    %v1102 = vpack.c.b16 %v1052, %v1047
    %v1103 = vpack.c.b16 %v1058, %v1053
    %v1104 = vpack.c.b16 %v1059, %v1054
    %v1105 = vpack.c.b16 %v1060, %v1055
    %v1106 = vpack.c.b16 %v1061, %v1056
    %v1107 = vpack.c.b16 %v1062, %v1057
    %v1108 = vpack.c.b16 %v1068, %v1063
    %v1109 = vpack.c.b16 %v1069, %v1064
    %v1110 = vpack.c.b16 %v1070, %v1065
    %v1111 = vpack.c.b16 %v1071, %v1066
    %v1112 = vpack.c.b16 %v1072, %v1067
    %v1154 = vlaneseq
    %v1155 = vshrl.u32 %v1154, 7
    %v1156 = vsub.s32 0, %v1155
    %v1157 = vrot.slane %v944, %v1156
    %v1158 = vlaneseq
    %v1159 = vshrl.u32 %v1158, 7
    %v1160 = vsub.s32 1, %v1159
    %v1161 = vrot.slane %v944, %v1160
    %v1162 = vlaneseq
    %v1163 = vshrl.u32 %v1162, 7
    %v1164 = vsub.s32 2, %v1163
    %v1165 = vrot.slane %v944, %v1164
    %v1166 = vlaneseq
    %v1167 = vshrl.u32 %v1166, 7
    %v1168 = vsub.s32 3, %v1167
    %v1169 = vrot.slane %v944, %v1168
    %v1170 = vlaneseq
    %v1171 = vshrl.u32 %v1170, 7
    %v1172 = vsub.s32 4, %v1171
    %v1173 = vrot.slane %v944, %v1172
    %1179 = vmatprep.subr.bf16.mxu0 %v1074
    %1180 = vmatpush1.bf16.msra.mxu0 %v1073
    %1181 = vmatprep.subr.bf16.mxu0 %v1079
    %1182 = vmatpush1.bf16.msra.mxu0 %v1078
    %1183 = vmatprep.subr.bf16.mxu0 %v1084
    %1184 = vmatpush1.bf16.msra.mxu0 %v1083
    %1185 = vmatprep.subr.bf16.mxu0 %v1089
    %1186 = vmatpush1.bf16.msra.mxu0 %v1088
    %1187 = vmatprep.subr.bf16.mxu0 %v1094
    %1188 = vmatpush1.bf16.msra.mxu0 %v1093
    %1189 = vmatprep.subr.bf16.mxu0 %v1099
    %1190 = vmatpush1.bf16.msra.mxu0 %v1098
    %1191 = vmatprep.subr.bf16.mxu0 %v1104
    %1192 = vmatpush1.bf16.msra.mxu0 %v1103
    %1193 = vmatprep.subr.bf16.mxu0 %v1109
    %1194 = vmatpush1.bf16.msra.mxu0 %v1108
    %1195 = vmatprep.subr.bf16.mxu0 0
    %1196 = vmatpush1.bf16.msra.mxu0 0
    %1197 = vmatprep.subr.bf16.mxu0 0
    %1198 = vmatpush1.bf16.msra.mxu0 0
    %1199 = vmatprep.subr.bf16.mxu0 0
    %1200 = vmatpush1.bf16.msra.mxu0 0
    %1201 = vmatprep.subr.bf16.mxu0 0
    %1202 = vmatpush1.bf16.msra.mxu0 0
    %1203 = vmatprep.subr.bf16.mxu0 0
    %1204 = vmatpush1.bf16.msra.mxu0 0
    %1205 = vmatprep.subr.bf16.mxu0 0
    %1206 = vmatpush1.bf16.msra.mxu0 0
    %1207 = vmatprep.subr.bf16.mxu0 0
    %1208 = vmatpush1.bf16.msra.mxu0 0
    %1209 = vmatprep.subr.bf16.mxu0 0
    %1210 = vmatpush1.bf16.msra.mxu0 0
    %1211 = vmatprep.mubr.bf16.mxu0 0
    %1212 = vmatmul.mubr.bf16.gmra.mrb[0].mxu0 %v895
    %v1213 = vpop.f32.mrb[0].mxu0
    %v1214 = vadd.f32 %v1157, %v1213
    %v1215 = vpop.f32.mrb[0].mxu0
    %v1216 = vadd.f32 %v1161, %v1215
    %v1217 = vpop.f32.mrb[0].mxu0
    %v1218 = vpop.f32.mrb[0].mxu0
    %1219 = vdwg.mxu0
    %1220 = vmatprep.subr.bf16.mxu0 %v1076
    %1221 = vmatpush1.bf16.msra.mxu0 %v1075
    %1222 = vmatprep.subr.bf16.mxu0 %v1081
    %1223 = vmatpush1.bf16.msra.mxu0 %v1080
    %1224 = vmatprep.subr.bf16.mxu0 %v1086
    %1225 = vmatpush1.bf16.msra.mxu0 %v1085
    %1226 = vmatprep.subr.bf16.mxu0 %v1091
    %1227 = vmatpush1.bf16.msra.mxu0 %v1090
    %1228 = vmatprep.subr.bf16.mxu0 %v1096
    %1229 = vmatpush1.bf16.msra.mxu0 %v1095
    %1230 = vmatprep.subr.bf16.mxu0 %v1101
    %1231 = vmatpush1.bf16.msra.mxu0 %v1100
    %1232 = vmatprep.subr.bf16.mxu0 %v1106
    %1233 = vmatpush1.bf16.msra.mxu0 %v1105
    %1234 = vmatprep.subr.bf16.mxu0 %v1111
    %1235 = vmatpush1.bf16.msra.mxu0 %v1110
    %1236 = vmatprep.subr.bf16.mxu0 0
    %1237 = vmatpush1.bf16.msra.mxu0 0
    %1238 = vmatprep.subr.bf16.mxu0 0
    %1239 = vmatpush1.bf16.msra.mxu0 0
    %1240 = vmatprep.subr.bf16.mxu0 0
    %1241 = vmatpush1.bf16.msra.mxu0 0
    %1242 = vmatprep.subr.bf16.mxu0 0
    %1243 = vmatpush1.bf16.msra.mxu0 0
    %1244 = vmatprep.subr.bf16.mxu0 0
    %1245 = vmatpush1.bf16.msra.mxu0 0
    %1246 = vmatprep.subr.bf16.mxu0 0
    %1247 = vmatpush1.bf16.msra.mxu0 0
    %1248 = vmatprep.subr.bf16.mxu0 0
    %1249 = vmatpush1.bf16.msra.mxu0 0
    %1250 = vmatprep.subr.bf16.mxu0 0
    %1251 = vmatpush1.bf16.msra.mxu0 0
    %1252 = vmatprep.mubr.bf16.mxu0 0
    %1253 = vmatmul.mubr.bf16.gmra.mrb[0].mxu0 %v895
    %v1254 = vpop.f32.mrb[0].mxu0
    %v1255 = vadd.f32 %v1165, %v1254
    %v1256 = vpop.f32.mrb[0].mxu0
    %v1257 = vadd.f32 %v1169, %v1256
    %v1258 = vpop.f32.mrb[0].mxu0
    %v1259 = vpop.f32.mrb[0].mxu0
    %1260 = vdwg.mxu0
    %1261 = vmatprep.subr.bf16.mxu0 0
    %1262 = vmatpush1.bf16.msra.mxu0 %v1077
    %1263 = vmatprep.subr.bf16.mxu0 0
    %1264 = vmatpush1.bf16.msra.mxu0 %v1082
    %1265 = vmatprep.subr.bf16.mxu0 0
    %1266 = vmatpush1.bf16.msra.mxu0 %v1087
    %1267 = vmatprep.subr.bf16.mxu0 0
    %1268 = vmatpush1.bf16.msra.mxu0 %v1092
    %1269 = vmatprep.subr.bf16.mxu0 0
    %1270 = vmatpush1.bf16.msra.mxu0 %v1097
    %1271 = vmatprep.subr.bf16.mxu0 0
    %1272 = vmatpush1.bf16.msra.mxu0 %v1102
    %1273 = vmatprep.subr.bf16.mxu0 0
    %1274 = vmatpush1.bf16.msra.mxu0 %v1107
    %1275 = vmatprep.subr.bf16.mxu0 0
    %1276 = vmatpush1.bf16.msra.mxu0 %v1112
    %1277 = vmatprep.subr.bf16.mxu0 0
    %1278 = vmatpush1.bf16.msra.mxu0 0
    %1279 = vmatprep.subr.bf16.mxu0 0
    %1280 = vmatpush1.bf16.msra.mxu0 0
    %1281 = vmatprep.subr.bf16.mxu0 0
    %1282 = vmatpush1.bf16.msra.mxu0 0
    %1283 = vmatprep.subr.bf16.mxu0 0
    %1284 = vmatpush1.bf16.msra.mxu0 0
    %1285 = vmatprep.subr.bf16.mxu0 0
    %1286 = vmatpush1.bf16.msra.mxu0 0
    %1287 = vmatprep.subr.bf16.mxu0 0
    %1288 = vmatpush1.bf16.msra.mxu0 0
    %1289 = vmatprep.subr.bf16.mxu0 0
    %1290 = vmatpush1.bf16.msra.mxu0 0
    %1291 = vmatprep.subr.bf16.mxu0 0
    %1292 = vmatpush1.bf16.msra.mxu0 0
    %1293 = vmatprep.mubr.bf16.mxu0 0
    %1294 = vmatmul.mubr.bf16.gmra.mrb[0].mxu0 %v895
    %v1295 = vpop.f32.mrb[0].mxu0
    %v1296 = vadd.f32 %v1173, %v1295
    %v1297 = vpop.f32.mrb[0].mxu0
    %v1298 = vpop.f32.mrb[0].mxu0
    %v1299 = vpop.f32.mrb[0].mxu0
    %1300 = vdwg.mxu0
    %v1306 = vcombine.low %v1214, %v1216
    %v1307 = vcombine.low %v1255, %v1257
    %v1309 = vunpack.c.l.s4 1966171168
    %v1310 = vunpack.c.0.s8 %v1309
    %v1311 = vlaneseq
    %v1312 = vshrl.u32 %v1311, 7
    %v1313 = vsub.s32 %v1310, %v1312
    %v1314 = vrot.slane %v1306, %v1313
    %v1316 = vunpack.c.l.s4 1966171168
    %v1317 = vunpack.c.0.s8 %v1316
    %v1318 = vlaneseq
    %v1319 = vshrl.u32 %v1318, 7
    %v1320 = vsub.s32 %v1317, %v1319
    %v1321 = vrot.slane %v1307, %v1320
    %v1323 = vunpack.c.l.s4 1966171168
    %v1324 = vunpack.c.0.s8 %v1323
    %v1325 = vlaneseq
    %v1326 = vshrl.u32 %v1325, 7
    %v1327 = vsub.s32 %v1324, %v1326
    %v1328 = vrot.slane %v1296, %v1327
    %v1329 = vcombine.low %v1314, %v1321
    %v1331 = vunpack.c.l.s4 1966171168
    %v1332 = vunpack.c.0.s8 %v1331
    %v1333 = vlaneseq
    %v1334 = vshrl.u32 %v1333, 7
    %v1335 = vsub.s32 %v1332, %v1334
    %v1336 = vrot.slane %v1329, %v1335
    %v1338 = vunpack.c.l.s4 1966171168
    %v1339 = vunpack.c.0.s8 %v1338
    %v1340 = vlaneseq
    %v1341 = vshrl.u32 %v1340, 7
    %v1342 = vsub.s32 %v1339, %v1341
    %v1343 = vrot.slane %v1328, %v1342
    %v1344 = vcombine.low %v1336, %v1343
    %v1346 = vlaneseq
    %vm1347 = vcmp.ge.s32.totalorder %v1346, 0
    %vm1348 = vcmp.lt.s32.totalorder %v1346, 640
    %vm1349 = vmand %vm1347, %vm1348
    %1350 = vst.msk [vmem:[#allocation8] sm:$0x1f] %vm1349, %v1344
    // Predicated region
    $region30: #{tpu_custom_call.1} parent=1 // pred_check
      _
    $region31: #{tpu_custom_call.1} parent=1 // pred_check_branch
      %1352 = sbr.rel (0) target = $region33
    $region32: #{tpu_custom_call.1} parent=1 // pred_region
      %s1354 = ssub.s32 80, 80
      %1355 = vsyncadd [#allocation4], %s1354
      %s1357 = sshll.u32 [#allocation8], 4
      %s1358 = int_to_ptr.vmem [resolvable:$true] %s1357
      %1360 = dma.vmem_to_hbm [thread:$0]  %s1358, 80, %s4, [#allocation4]
    $region33: #{tpu_custom_call.1} parent=1 // pred_fallthru
      _
    // Predicated region
    $region34: #{tpu_custom_call.1} parent=1 // pred_check
      _
    $region35: #{tpu_custom_call.1} parent=1 // pred_check_branch
      %1362 = sbr.rel (0) target = $region37
    $region36: #{tpu_custom_call.1} parent=1 // pred_region
      %1363 = dma.done [#allocation4], 80
    $region37: #{tpu_custom_call.1} parent=1 // pred_fallthru
      _
    %1364 = vsyncpa [#allocation3], 1
    %1365 = vsyncpa [#allocation6], 1
    %1366 = vsyncpa [#allocation4], 1

</llo_original>
